<compile_context>
chip_gen: v7x
topology: tpu7x:2x2x1
jax: 0.10.0
libtpu: 0.0.40
codegen_flags: <defaults>
</compile_context>

<pallas_src>
import jax
import jax.numpy as jnp
from jax import lax
from jax.experimental import pallas as pl
from jax.experimental.pallas import tpu as pltpu


# ---------------------------------------------------------------------------
# Kernels
# ---------------------------------------------------------------------------

def _make_full_rows_kernel(r_in: int, pad_rows: int):
    """Untiled-rows variant: one row block covers the whole (padded) row dim.
    Copies the r_in valid rows and zero-fills the trailing pad_rows."""

    def kernel(x_ref, o_ref):
        o_ref[:, :r_in, :] = x_ref[...]
        if pad_rows:  # static Python branch
            o_ref[:, r_in:, :] = jnp.zeros(
                (o_ref.shape[0], pad_rows, o_ref.shape[2]), o_ref.dtype
            )

    return kernel


def _make_tiled_rows_kernel(r_in: int, tp: int, n_ptiles: int):
    """Row-tiled variant: output rows tiled in chunks of `tp` (tp | r_out,
    tp % 8 == 0, tp > pad_rows).  Only the last row tile crosses the valid-row
    boundary: earlier tiles are a plain copy (unmasked stores), the last one is
    a masked select.  The small VPU select on one tile is hidden under DMA."""

    def kernel(x_ref, o_ref):
        j = pl.program_id(1)

        @pl.when(j != n_ptiles - 1)
        def _plain():
            o_ref[...] = x_ref[...]

        @pl.when(j == n_ptiles - 1)
        def _boundary():
            rows = j * tp + lax.broadcasted_iota(jnp.int32, (tp, 1), 0)
            mask = (rows < r_in)[None, :, :]
            o_ref[...] = jnp.where(mask, x_ref[...], jnp.zeros_like(x_ref[...]))

    return kernel


# ---------------------------------------------------------------------------
# Tiling heuristics
# ---------------------------------------------------------------------------

def _num_tensorcores_per_chip() -> int:
    """2 TensorCores per chip on v7x, 1 on v5e/v6e.  Never raises."""
    try:
        kind = (jax.devices()[0].device_kind or "").lower()
    except Exception:
        return 1
    return 2 if ("v7" in kind or "7x" in kind) else 1


def _divisors_desc(n: int):
    return sorted((d for d in range(1, n + 1) if n % d == 0), reverse=True)


def _choose_tiles(B, r_in, r_out, C, itemsize, pad_rows, target_bytes, min_steps):
    """Pick (tb, tp): tb | B, tp | r_out.  tp is either r_out (no row tiling)
    or a multiple of 8 that is > pad_rows (so the last row tile always owns at
    least one valid input row).  Tiles are kept under `target_bytes`, and the
    grid gets >= min_steps total steps when possible (v7x megacore)."""
    row_bytes = C * itemsize

    # Row tile: prefer the whole padded row dim if it fits the budget.
    tp = r_out
    if r_out * row_bytes > target_bytes:
        for cand in _divisors_desc(r_out):
            if cand == r_out:
                continue
            if cand % 8 != 0:            # (8,128) second-minor constraint
                continue
            if cand <= pad_rows:         # last input block must hold valid rows
                continue
            if cand * row_bytes <= target_bytes:
                tp = cand
                break
        # else: no valid divisor -> fall back to the full row dim (vmem_limit
        # below is raised accordingly).

    # Batch tile: biggest divisor of B whose output tile stays under budget.
    tile_rows_bytes = tp * row_bytes
    tb = 1
    for cand in _divisors_desc(B):
        if cand * tile_rows_bytes <= target_bytes:
            tb = cand
            break

    def steps(tb_, tp_):
        return (B // tb_) * (r_out // tp_)

    # Multi-TC parts (v7x): make sure both cores get work.  Single-TC parts
    # (v5e/v6e) keep the maximal tiles (extra grid steps are pure overhead).
    if steps(tb, tp) < min_steps:
        for cand in _divisors_desc(B):
            if steps(cand, tp) >= min_steps:
                tb = cand
                break
        else:
            tb = 1
    if steps(tb, tp) < min_steps and tp == r_out:
        for cand in _divisors_desc(r_out):
            if cand == r_out:
                continue
            if cand % 8 == 0 and cand > pad_rows and steps(tb, cand) >= min_steps:
                tp = cand
                break

    return tb, tp


# ---------------------------------------------------------------------------
# Forward
# ---------------------------------------------------------------------------

def seg_merging_forward(x, divide: int, *, target_tile_bytes: int = 3 << 20):
    """x: (B, p, pl, d_model) -> (B, ceil(p/divide), pl*divide, d_model)."""
    B, p, pl_len, d_model = x.shape
    p_out = -(-p // divide)
    p_pad = p_out * divide
    pad = p_pad - p
    out_shape_final = (B, p_out, pl_len * divide, d_model)

    # (1) Evenly divisible: pure contiguous reshape -> skip the kernel entirely.
    if pad == 0:
        return x.reshape(out_shape_final)

    itemsize = x.dtype.itemsize

    # (4) Lane-dense contiguous fold of the trailing dims.  Padding `pad`
    # patches in the 4-D view == padding `pad` rows of this folded view.
    C = pl_len * d_model
    r_in, r_out, pad_rows = p, p_pad, pad
    x2 = x.reshape(B, r_in, C)  # contiguous reshape: free, no transpose

    min_steps = 2 if _num_tensorcores_per_chip() >= 2 else 1
    tb, tp = _choose_tiles(B, r_in, r_out, C, itemsize, pad_rows,
                           target_tile_bytes, min_steps)
    n_ptiles = r_out // tp
    grid = (B // tb, n_ptiles)

    if n_ptiles == 1:
        kernel = _make_full_rows_kernel(r_in, pad_rows)
        in_block = (tb, r_in, C)  # full row dim -> (8,128) rule satisfied
        in_spec = pl.BlockSpec(in_block, lambda b, j: (b, 0, 0))
    else:
        kernel = _make_tiled_rows_kernel(r_in, tp, n_ptiles)
        in_block = (tb, tp, C)
        in_spec = pl.BlockSpec(in_block, lambda b, j: (b, j, 0))
    out_spec = pl.BlockSpec((tb, tp, C), lambda b, j: (b, j, 0))

    in_tile_bytes = tb * in_block[1] * C * itemsize
    out_tile_bytes = tb * tp * C * itemsize
    # Double-buffered in + out tiles plus slack; capped at v7x physical VMEM.
    vmem_limit = int(min(64 << 20, 2 * (in_tile_bytes + out_tile_bytes) + (8 << 20)))

    out2 = pl.pallas_call(
        kernel,
        out_shape=jax.ShapeDtypeStruct((B, r_out, C), x.dtype),
        grid_spec=pltpu.PrefetchScalarGridSpec(
            num_scalar_prefetch=0,
            grid=grid,
            in_specs=[in_spec],
            out_specs=out_spec,
        ),
        compiler_params=pltpu.CompilerParams(
            dimension_semantics=("parallel", "parallel"),
            vmem_limit_bytes=vmem_limit,
        ),
    )(x2)

    # The merge itself is a pure contiguous reshape (no data movement).
    return out2.reshape(out_shape_final)


# ---------------------------------------------------------------------------
# Reference + tests
# ---------------------------------------------------------------------------

def _reference(x, divide: int):
    B, p, pl_len, d_model = x.shape
    p_out = -(-p // divide)
    pad = p_out * divide - p
    if pad:
        x = jnp.concatenate([x, jnp.zeros((B, pad, pl_len, d_model), x.dtype)], axis=1)
    return x.reshape(B, p_out, pl_len * divide, d_model)


if __name__ == "__main__":
    key = jax.random.PRNGKey(0)
    k1, k2, k3 = jax.random.split(key, 3)

    # Case 1: p not divisible by divide -> padding path, untiled rows.
    b, p, ts_d, d_model = 2, 7, 4, 32
    divide = 2
    x = jax.random.normal(k1, (b, p, ts_d, d_model), dtype=jnp.float32)
    out = jax.block_until_ready(seg_merging_forward(x, divide))
    ref = _reference(x, divide)
    assert out.shape == (b, 4, ts_d * divide, d_model), out.shape
    assert jnp.array_equal(out, ref)

    # Case 2: evenly divisible -> short-circuit (no pallas_call at all).
    x2 = jax.random.normal(k2, (2, 8, 4, 32), dtype=jnp.float32)
    out2 = jax.block_until_ready(seg_merging_forward(x2, 4))
    ref2 = _reference(x2, 4)
    assert out2.shape == (2, 2, 16, 32), out2.shape
    assert jnp.array_equal(out2, ref2)

    # Case 3: force the row-tiled (masked boundary) path with a tiny tile budget.
    x3 = jax.random.normal(k3, (2, 23, 4, 32), dtype=jnp.float32)
    out3 = jax.block_until_ready(
        seg_merging_forward(x3, 4, target_tile_bytes=4096))
    ref3 = _reference(x3, 4)
    assert out3.shape == (2, 6, 16, 32), out3.shape
    assert jnp.array_equal(out3, ref3)

    print("KERNEL_OK")
</pallas_src>

<mosaic_0001>
module attributes {stable_mosaic.version = 11 : i64} {
  func.func @kernel(%arg0: i32, %arg1: i32, %arg2: memref<2x7x128xf32, #tpu.memory_space<vmem>>, %arg3: memref<2x8x128xf32, #tpu.memory_space<vmem>>) attributes {dimension_semantics = [#tpu.dimension_semantics<parallel>, #tpu.dimension_semantics<parallel>], iteration_bounds = array<i64: 1, 1>, scalar_prefetch = 0 : i64, scratch_operands = 0 : i64, tpu.core_type = #tpu.core_type<tc>, window_params = [{transform_indices = @transform_0, window_bounds = array<i64: 2, 7, 128>}, {transform_indices = @transform_1, window_bounds = array<i64: 2, 8, 128>}]} {
    %c0 = arith.constant 0 : index
    %c0_0 = arith.constant 0 : index
    %c0_1 = arith.constant 0 : index
    %0 = vector.load %arg2[%c0, %c0_0, %c0_1] : memref<2x7x128xf32, #tpu.memory_space<vmem>>, vector<2x7x128xf32>
    %c0_2 = arith.constant 0 : index
    %c0_3 = arith.constant 0 : index
    %c0_4 = arith.constant 0 : index
    %1 = vector.load %arg3[%c0_2, %c0_3, %c0_4] : memref<2x8x128xf32, #tpu.memory_space<vmem>>, vector<2x7x128xf32>
    tpu.vector_store %arg3[%c0_2, %c0_3, %c0_4], %0 {strides = array<i32>} : memref<2x8x128xf32, #tpu.memory_space<vmem>>, vector<2x7x128xf32>,
    %cst = arith.constant 0.000000e+00 : f32
    %2 = vector.broadcast %cst : f32 to vector<2x1x128xf32>
    %c0_5 = arith.constant 0 : index
    %c7 = arith.constant 7 : index
    %c0_6 = arith.constant 0 : index
    %3 = vector.load %arg3[%c0_5, %c7, %c0_6] : memref<2x8x128xf32, #tpu.memory_space<vmem>>, vector<2x1x128xf32>
    tpu.vector_store %arg3[%c0_5, %c7, %c0_6], %2 {strides = array<i32>} : memref<2x8x128xf32, #tpu.memory_space<vmem>>, vector<2x1x128xf32>,
    return
  }
  func.func @transform_0(%arg0: i32, %arg1: i32) -> (i32, i32, i32) {
    %c0_i32 = arith.constant 0 : i32
    %c0_i32_0 = arith.constant 0 : i32
    %c0_i32_1 = arith.constant 0 : i32
    return %arg0, %c0_i32, %c0_i32_0 : i32, i32, i32
  }
  func.func @transform_1(%arg0: i32, %arg1: i32) -> (i32, i32, i32) {
    %c0_i32 = arith.constant 0 : i32
    %c0_i32_0 = arith.constant 0 : i32
    return %arg0, %arg1, %c0_i32 : i32, i32, i32
  }
}

</mosaic_0001>

<llo_original>
// kernel: tpu_custom_call.1
$region0: #{tpu_custom_call.1}
  #allocation0 [shape = 'u32[]', space=smem, size = 0x4, offset = 0x4, fixed_abs, tag = 'smem constant byte address 0x4 - core index']
  #allocation1 [shape = 'u32[144,128]{1,0:T(1,128)}', space=vmem, size = 0x12000, scoped, tag = 'internal scratch']
  %s0 = inlined_call_operand.vmem [shape: f32[2,7,128], index: 0, kind: input, shape index: {}]
  %s1 = inlined_call_operand.hbm [shape: f32[2,8,128], index: 1, kind: output, shape index: {}]
  %s2 = sld [smem:[#allocation0]]
  $region14: #{tpu_custom_call.1} parent=0
    _
  %s4 = ssub.s32 1, %s2
  %s5 = scalar_select 0, %s4, %s2
  $region1: #{tpu_custom_call.1} parent=0
    #allocation2 [shape = 'u8[8192]{0}', space=vmem, size = 0x2000, scoped, tag = 'output window, operand 0, single buffered']
    #allocation3 [shape = 's32[1]{0}', space=sflag, size = 0x4, scoped, tag = 'scoped memory for tpu_custom_call.1']
    %6 = vsyncpa [#allocation3], 0
    // Predicated region
    $region2: #{tpu_custom_call.1} parent=1 // pred_check
      _
    $region3: #{tpu_custom_call.1} parent=1 // pred_check_branch
      %8 = sbr.rel (0) target = $region5
    $region4: #{tpu_custom_call.1} parent=1 // pred_region
      _
    $region5: #{tpu_custom_call.1} parent=1 // pred_fallthru
      _
    %v9 = vld [vmem:[%s0] sm:$0x7f]
    %v10 = vld [vmem:[%s0 + $0x8] sm:$0x7f]
    %11 = vst [vmem:[#allocation2] sm:$0x7f] %v9
    %12 = vst [vmem:[#allocation2 + $0x8] sm:$0x7f] %v10
    %13 = vst [vmem:[#allocation2 + $0x7] sm:$0x1] 0.0
    %14 = vst [vmem:[#allocation2 + $0xf] sm:$0x1] 0.0
    // Predicated region
    $region6: #{tpu_custom_call.1} parent=1 // pred_check
      _
    $region7: #{tpu_custom_call.1} parent=1 // pred_check_branch
      %16 = sbr.rel (0) target = $region9
    $region8: #{tpu_custom_call.1} parent=1 // pred_region
      %s18 = ssub.s32 256, 256
      %19 = vsyncadd [#allocation3], %s18
      %s20 = sshll.u32 [#allocation2], 4
      %s21 = int_to_ptr.vmem [resolvable:$true] %s20
      %26 = dma.vmem_to_hbm [thread:$0]  %s21, 256, %s1, [#allocation3], 128, 128, 8
    $region9: #{tpu_custom_call.1} parent=1 // pred_fallthru
      _
    // Predicated region
    $region10: #{tpu_custom_call.1} parent=1 // pred_check
      _
    $region11: #{tpu_custom_call.1} parent=1 // pred_check_branch
      %28 = sbr.rel (0) target = $region13
    $region12: #{tpu_custom_call.1} parent=1 // pred_region
      %29 = dma.done [#allocation3], 256
    $region13: #{tpu_custom_call.1} parent=1 // pred_fallthru
      _
    %30 = vsyncpa [#allocation3], 1

</llo_original>
